<compile_context>
chip_gen: v5e
topology: v5e:2x2
jax: 0.10.0
libtpu: 0.0.40
codegen_flags: <defaults>
</compile_context>

<pallas_src>
import math
import jax
import jax.numpy as jnp
from jax.experimental import pallas as pl
from jax.experimental.pallas import tpu as pltpu


def fcn_kernel(x_ref, wmid_ref, vecs_ref, o_ref):
    """Forward pass for one lane-dense batch tile (batch on lanes).

    Shapes (f32):
      x_ref    : (1, tile_n)   input row, batch on lanes
      wmid_ref : (3, 32, 32)   stacked transposed hidden weights (W^T)
      vecs_ref : (32, 8)       packed columns: [w1^T, b1^T, b2^T, b3^T, b4^T,
                               w5, b5(bcast), 0]
      o_ref    : (1, tile_n)   lane-dense output row
    """
    x = x_ref[...]                                   # (1, tn)
    vecs = vecs_ref[...]                             # (32, 8)
    w1 = vecs[:, 0:1]                                # (32, 1)
    b1 = vecs[:, 1:2]                                # (32, 1)
    w5 = vecs[:, 5:6]                                # (32, 1)
    b5 = vecs[0:1, 6:7]                              # (1, 1)

    # Layer 1 (1 -> 32): degenerate K=1 matmul done as a VPU broadcast outer
    # product: h[f, n] = tanh(w1[f] * x[n] + b1[f]).
    h = jnp.tanh(w1 * x + b1)                        # (32, tn)

    # Layers 2-4 (32 -> 32): MXU matmuls, f32 accumulation. With M=K=32 the
    # MXU is essentially free filler; the binding compute slots are EUP (tanh)
    # and VPU, so no matmul-shape tricks are attempted.
    for l in range(3):
        h = jnp.tanh(
            jnp.dot(wmid_ref[l], h, preferred_element_type=jnp.float32)
            + vecs[:, 2 + l:3 + l])                  # (32, tn)

    # Layer 5 (32 -> 1): VPU multiply + sublane (XLU) reduction -> lane-dense row.
    y = jnp.sum(h * w5, axis=0, keepdims=True) + b5  # (1, tn)
    o_ref[...] = y.astype(o_ref.dtype)


def prepare_params(params):
    """One-time packing of the 10 tiny parameter tensors into 2 arrays.

    Keep this OUT of the per-call hot path: under jit these transposes/stacks
    would otherwise be re-emitted on every forward call.
    """
    (w1, b1), (w2, b2), (w3, b3), (w4, b4), (w5, b5) = params
    wmid = jnp.stack([w2.T, w3.T, w4.T]).astype(jnp.float32)      # (3, 32, 32)
    cols = [
        w1.T[:, 0],                                   # w1^T       (32,)
        b1.T[:, 0],                                   # b1^T       (32,)
        b2.T[:, 0], b3.T[:, 0], b4.T[:, 0],           # b2..b4^T   (32,) each
        w5[:, 0],                                     # w5 column  (32,)
        jnp.broadcast_to(b5[0, 0], (32,)),            # b5 (bcast) (32,)
        jnp.zeros((32,), jnp.float32),                # padding column
    ]
    vecs = jnp.stack(cols, axis=1).astype(jnp.float32)            # (32, 8)
    return wmid, vecs


def fcn_forward(x, packed, *, tile_n=512):
    """x: (N, 1) float32.  packed: output of prepare_params()."""
    wmid, vecs = packed
    N = x.shape[0]
    x_row = x.reshape(1, N).astype(jnp.float32)       # free relayout (1, N)

    # Force any user-supplied tile to a multiple of 128 lanes.
    tile_n = 128 * pl.cdiv(max(int(tile_n), 128), 128)

    if N <= tile_n:
        # Small-N path (covers the spec's N=500): one grid step, full-array
        # blocks (allowed even when not 128-divisible), no padding / slicing.
        tile_n = N
        n_tiles = 1
        n_pad = N
        x_in = x_row
    else:
        # Large-N path: 512-lane tiles keep the live (32, tile_n) activation at
        # ~16 vregs (no spill) and give >= 2 "parallel" steps for megacore
        # sharding on v7x.
        n_tiles = pl.cdiv(N, tile_n)
        n_pad = n_tiles * tile_n
        x_in = jnp.pad(x_row, ((0, 0), (0, n_pad - N)))

    def param_spec(arr):
        # Whole (tiny) parameter tensor resident at every grid step.
        nd = arr.ndim
        return pl.BlockSpec(arr.shape, lambda i, _nd=nd: (0,) * _nd)

    out = pl.pallas_call(
        fcn_kernel,
        out_shape=jax.ShapeDtypeStruct((1, n_pad), jnp.float32),
        grid_spec=pltpu.PrefetchScalarGridSpec(
            num_scalar_prefetch=0,
            grid=(n_tiles,),
            in_specs=[
                pl.BlockSpec((1, tile_n), lambda i: (0, i)),  # x tile (lane-dense)
                param_spec(wmid),
                param_spec(vecs),
            ],
            out_specs=pl.BlockSpec((1, tile_n), lambda i: (0, i)),
        ),
        compiler_params=pltpu.CompilerParams(
            dimension_semantics=("parallel",)),
    )(x_in, wmid, vecs)

    if n_pad != N:
        out = out[:, :N]
    return out.reshape(N, 1)


def init_params(key):
    """Deterministic init mimicking PyTorch nn.Linear default (U[-1/sqrt(fan_in), +])."""
    sizes = [(1, 32), (32, 32), (32, 32), (32, 32), (32, 1)]
    params = []
    for (fan_in, fan_out) in sizes:
        key, kw, kb = jax.random.split(key, 3)
        bound = 1.0 / math.sqrt(fan_in)
        w = jax.random.uniform(kw, (fan_in, fan_out), jnp.float32, -bound, bound)
        b = jax.random.uniform(kb, (1, fan_out), jnp.float32, -bound, bound)
        params.append((w, b))
    return params


def fcn_reference(x, params):
    """Pure-JAX reference for correctness checking (exact f32 matmuls)."""
    h = x
    for i, (w, b) in enumerate(params):
        h = jnp.dot(h, w, precision=jax.lax.Precision.HIGHEST) + b
        if i < len(params) - 1:
            h = jnp.tanh(h)
    return h


if __name__ == "__main__":
    key = jax.random.PRNGKey(0)
    params = init_params(key)
    packed = prepare_params(params)

    # Same workload as the PyTorch spec: torch.linspace(-1, 1, 500).view(-1, 1)
    # -> exercises the single-step (no-padding) path.
    N = 500
    x = jnp.linspace(-1.0, 1.0, N, dtype=jnp.float32).reshape(-1, 1)
    y = jax.block_until_ready(fcn_forward(x, packed))
    y_ref = fcn_reference(x, params)
    assert y.shape == (N, 1)
    assert jnp.allclose(y, y_ref, atol=1e-5, rtol=1e-5), "mismatch vs reference (N=500)"

    # Larger batch -> exercises the tiled/padded multi-step path (4 x 512 lanes).
    N2 = 2000
    x2 = jnp.linspace(-1.0, 1.0, N2, dtype=jnp.float32).reshape(-1, 1)
    y2 = jax.block_until_ready(fcn_forward(x2, packed))
    y2_ref = fcn_reference(x2, params)
    assert y2.shape == (N2, 1)
    assert jnp.allclose(y2, y2_ref, atol=1e-5, rtol=1e-5), "mismatch vs reference (N=2000)"

    print("KERNEL_OK")
</pallas_src>

<mosaic_0001>
module attributes {stable_mosaic.version = 11 : i64} {
  func.func @fcn_kernel(%arg0: i32, %arg1: memref<1x500xf32, #tpu.memory_space<vmem>>, %arg2: memref<3x32x32xf32, #tpu.memory_space<vmem>>, %arg3: memref<32x8xf32, #tpu.memory_space<vmem>>, %arg4: memref<1x500xf32, #tpu.memory_space<vmem>>) attributes {dimension_semantics = [#tpu.dimension_semantics<parallel>], iteration_bounds = array<i64: 1>, scalar_prefetch = 0 : i64, scratch_operands = 0 : i64, tpu.core_type = #tpu.core_type<tc>, window_params = [{transform_indices = @transform_0, window_bounds = array<i64: 1, 500>}, {pipeline_mode = #tpu.pipeline_mode<synchronous>, transform_indices = @transform_1, window_bounds = array<i64: 3, 32, 32>}, {pipeline_mode = #tpu.pipeline_mode<synchronous>, transform_indices = @transform_2, window_bounds = array<i64: 32, 8>}, {transform_indices = @transform_3, window_bounds = array<i64: 1, 500>}]} {
    %c0 = arith.constant 0 : index
    %c0_0 = arith.constant 0 : index
    %0 = vector.load %arg1[%c0, %c0_0] : memref<1x500xf32, #tpu.memory_space<vmem>>, vector<1x500xf32>
    %c0_1 = arith.constant 0 : index
    %c0_2 = arith.constant 0 : index
    %1 = vector.load %arg3[%c0_1, %c0_2] : memref<32x8xf32, #tpu.memory_space<vmem>>, vector<32x8xf32>
    %2 = vector.extract_strided_slice %1 {offsets = [0, 0], sizes = [32, 1], strides = [1, 1]} : vector<32x8xf32> to vector<32x1xf32>
    %3 = vector.extract_strided_slice %1 {offsets = [0, 1], sizes = [32, 1], strides = [1, 1]} : vector<32x8xf32> to vector<32x1xf32>
    %4 = vector.extract_strided_slice %1 {offsets = [0, 5], sizes = [32, 1], strides = [1, 1]} : vector<32x8xf32> to vector<32x1xf32>
    %5 = vector.extract_strided_slice %1 {offsets = [0, 6], sizes = [1, 1], strides = [1, 1]} : vector<32x8xf32> to vector<1x1xf32>
    %6 = vector.broadcast %2 : vector<32x1xf32> to vector<32x500xf32>
    %7 = vector.broadcast %0 : vector<1x500xf32> to vector<32x500xf32>
    %8 = arith.mulf %6, %7 : vector<32x500xf32>
    %9 = vector.broadcast %3 : vector<32x1xf32> to vector<32x500xf32>
    %10 = arith.addf %8, %9 : vector<32x500xf32>
    %11 = math.tanh %10 : vector<32x500xf32>
    %c0_3 = arith.constant 0 : index
    %c0_4 = arith.constant 0 : index
    %c0_5 = arith.constant 0 : index
    %12 = vector.load %arg2[%c0_3, %c0_4, %c0_5] : memref<3x32x32xf32, #tpu.memory_space<vmem>>, vector<1x32x32xf32>
    %13 = vector.shape_cast %12 : vector<1x32x32xf32> to vector<32x32xf32>
    %cst = arith.constant dense<0.000000e+00> : vector<32x500xf32>
    %14 = tpu.matmul %13, %11, %cst {dimension_numbers = #tpu.dot_dimension_numbers<[1], [0], [0], [1], [0, 0, 1, 1], [], []>} : vector<32x32xf32>, vector<32x500xf32>, vector<32x500xf32> -> vector<32x500xf32>
    %15 = vector.extract_strided_slice %1 {offsets = [0, 2], sizes = [32, 1], strides = [1, 1]} : vector<32x8xf32> to vector<32x1xf32>
    %16 = vector.broadcast %15 : vector<32x1xf32> to vector<32x500xf32>
    %17 = arith.addf %14, %16 : vector<32x500xf32>
    %18 = math.tanh %17 : vector<32x500xf32>
    %c1 = arith.constant 1 : index
    %c0_6 = arith.constant 0 : index
    %c0_7 = arith.constant 0 : index
    %19 = vector.load %arg2[%c1, %c0_6, %c0_7] : memref<3x32x32xf32, #tpu.memory_space<vmem>>, vector<1x32x32xf32>
    %20 = vector.shape_cast %19 : vector<1x32x32xf32> to vector<32x32xf32>
    %cst_8 = arith.constant dense<0.000000e+00> : vector<32x500xf32>
    %21 = tpu.matmul %20, %18, %cst_8 {dimension_numbers = #tpu.dot_dimension_numbers<[1], [0], [0], [1], [0, 0, 1, 1], [], []>} : vector<32x32xf32>, vector<32x500xf32>, vector<32x500xf32> -> vector<32x500xf32>
    %22 = vector.extract_strided_slice %1 {offsets = [0, 3], sizes = [32, 1], strides = [1, 1]} : vector<32x8xf32> to vector<32x1xf32>
    %23 = vector.broadcast %22 : vector<32x1xf32> to vector<32x500xf32>
    %24 = arith.addf %21, %23 : vector<32x500xf32>
    %25 = math.tanh %24 : vector<32x500xf32>
    %c2 = arith.constant 2 : index
    %c0_9 = arith.constant 0 : index
    %c0_10 = arith.constant 0 : index
    %26 = vector.load %arg2[%c2, %c0_9, %c0_10] : memref<3x32x32xf32, #tpu.memory_space<vmem>>, vector<1x32x32xf32>
    %27 = vector.shape_cast %26 : vector<1x32x32xf32> to vector<32x32xf32>
    %cst_11 = arith.constant dense<0.000000e+00> : vector<32x500xf32>
    %28 = tpu.matmul %27, %25, %cst_11 {dimension_numbers = #tpu.dot_dimension_numbers<[1], [0], [0], [1], [0, 0, 1, 1], [], []>} : vector<32x32xf32>, vector<32x500xf32>, vector<32x500xf32> -> vector<32x500xf32>
    %29 = vector.extract_strided_slice %1 {offsets = [0, 4], sizes = [32, 1], strides = [1, 1]} : vector<32x8xf32> to vector<32x1xf32>
    %30 = vector.broadcast %29 : vector<32x1xf32> to vector<32x500xf32>
    %31 = arith.addf %28, %30 : vector<32x500xf32>
    %32 = math.tanh %31 : vector<32x500xf32>
    %33 = vector.broadcast %4 : vector<32x1xf32> to vector<32x500xf32>
    %34 = arith.mulf %32, %33 : vector<32x500xf32>
    %cst_12 = arith.constant dense<0.000000e+00> : vector<500xf32>
    %35 = vector.multi_reduction <add>, %34, %cst_12 [0] : vector<32x500xf32> to vector<500xf32>
    %36 = vector.shape_cast %35 : vector<500xf32> to vector<1x500xf32>
    %37 = vector.broadcast %5 : vector<1x1xf32> to vector<1x500xf32>
    %38 = arith.addf %36, %37 : vector<1x500xf32>
    %c0_13 = arith.constant 0 : index
    %c0_14 = arith.constant 0 : index
    %39 = vector.load %arg4[%c0_13, %c0_14] : memref<1x500xf32, #tpu.memory_space<vmem>>, vector<1x500xf32>
    tpu.vector_store %arg4[%c0_13, %c0_14], %38 {strides = array<i32>} : memref<1x500xf32, #tpu.memory_space<vmem>>, vector<1x500xf32>,
    return
  }
  func.func @transform_0(%arg0: i32) -> (i32, i32) {
    %c0_i32 = arith.constant 0 : i32
    %c0_i32_0 = arith.constant 0 : i32
    return %c0_i32, %arg0 : i32, i32
  }
  func.func @transform_1(%arg0: i32) -> (i32, i32, i32) {
    %c0_i32 = arith.constant 0 : i32
    %c0_i32_0 = arith.constant 0 : i32
    %c0_i32_1 = arith.constant 0 : i32
    %c0_i32_2 = arith.constant 0 : i32
    return %c0_i32, %c0_i32_0, %c0_i32_1 : i32, i32, i32
  }
  func.func @transform_2(%arg0: i32) -> (i32, i32) {
    %c0_i32 = arith.constant 0 : i32
    %c0_i32_0 = arith.constant 0 : i32
    %c0_i32_1 = arith.constant 0 : i32
    return %c0_i32, %c0_i32_0 : i32, i32
  }
  func.func @transform_3(%arg0: i32) -> (i32, i32) {
    %c0_i32 = arith.constant 0 : i32
    %c0_i32_0 = arith.constant 0 : i32
    return %c0_i32, %arg0 : i32, i32
  }
}

</mosaic_0001>

<llo_original>
// kernel: tpu_custom_call.1
$region0: #{tpu_custom_call.1}
  #allocation0 [shape = 'u32[]', space=smem, size = 0x4, offset = 0x4, fixed_abs, tag = 'smem constant byte address 0x4 - core index']
  #allocation1 [shape = 'u32[72,128]{1,0:T(1,128)}', space=vmem, size = 0x9000, scoped, tag = 'internal scratch']
  %s0 = inlined_call_operand.vmem [shape: f32[1,500], index: 0, kind: input, shape index: {}]
  %s1 = inlined_call_operand.hbm [shape: f32[3,32,32], index: 1, kind: input, shape index: {}]
  %s2 = inlined_call_operand.vmem [shape: f32[32,8], index: 2, kind: input, shape index: {}]
  %s3 = inlined_call_operand.hbm [shape: f32[1,500], index: 3, kind: output, shape index: {}]
  %s4 = sld [smem:[#allocation0]]
  $region26: #{tpu_custom_call.1} parent=0
    _
  %s6 = ssub.s32 1, %s4
  %s7 = scalar_select 0, %s6, %s4
  $region1: #{tpu_custom_call.1} parent=0
    #allocation2 [shape = 'u8[49152]{0}', space=vmem, size = 0xc000, scoped, tag = 'input window, operand 1, single buffered']
    #allocation3 [shape = 's32[1]{0}', space=sflag, size = 0x4, scoped, tag = 'scoped memory for tpu_custom_call.1']
    #allocation4 [shape = 's32[1]{0}', space=sflag, size = 0x4, scoped, tag = 'scoped memory for tpu_custom_call.1']
    #allocation5 [shape = 'u8[2048]{0}', space=vmem, size = 0x800, scoped, tag = 'output window, operand 0, single buffered']
    %8 = vsyncpa [#allocation3], 0
    %9 = vsyncpa [#allocation4], 0
    // Predicated region
    $region2: #{tpu_custom_call.1} parent=1 // pred_check
      _
    $region3: #{tpu_custom_call.1} parent=1 // pred_check_branch
      %11 = sbr.rel (0) target = $region5
    $region4: #{tpu_custom_call.1} parent=1 // pred_region
      _
    $region5: #{tpu_custom_call.1} parent=1 // pred_fallthru
      _
    // Predicated region
    $region6: #{tpu_custom_call.1} parent=1 // pred_check
      _
    $region7: #{tpu_custom_call.1} parent=1 // pred_check_branch
      %13 = sbr.rel (0) target = $region9
    $region8: #{tpu_custom_call.1} parent=1 // pred_region
      %15 = vsyncadd [#allocation3], 0
      %s16 = sshll.u32 %s1, 4
      %s17 = int_to_ptr.hbm [resolvable:$true] %s16
      %s18 = sshll.u32 [#allocation2], 4
      %s19 = int_to_ptr.vmem [resolvable:$true] %s18
      %24 = dma.hbm_to_vmem [thread:$0]  %s17, 1536, %s19, [#allocation3], 128, 128, 8
    $region9: #{tpu_custom_call.1} parent=1 // pred_fallthru
      _
    // Predicated region
    $region10: #{tpu_custom_call.1} parent=1 // pred_check
      _
    $region11: #{tpu_custom_call.1} parent=1 // pred_check_branch
      %26 = sbr.rel (0) target = $region13
    $region12: #{tpu_custom_call.1} parent=1 // pred_region
      _
    $region13: #{tpu_custom_call.1} parent=1 // pred_fallthru
      _
    // Predicated region
    $region14: #{tpu_custom_call.1} parent=1 // pred_check
      _
    $region15: #{tpu_custom_call.1} parent=1 // pred_check_branch
      %28 = sbr.rel (0) target = $region17
    $region16: #{tpu_custom_call.1} parent=1 // pred_region
      %30 = dma.done [#allocation3], 1536
    $region17: #{tpu_custom_call.1} parent=1 // pred_fallthru
      _
    %v31 = vld [vmem:[%s0] sm:$0xf]
    %v32 = vld [vmem:[%s2] sm:$0xff]
    %v33 = vld [vmem:[%s2 + $0x8] sm:$0xff]
    %v34 = vld [vmem:[%s2 + $0x10] sm:$0xff]
    %v35 = vld [vmem:[%s2 + $0x18] sm:$0xff]
    %37 = vset.pattern.permute.xlu0 0
    %38 = vperm.xlu0 %37, %v32
    %v39 = vpop.permute.xlu0 %38
    %42 = vset.pattern.permute.xlu0 0
    %43 = vperm.xlu0 %42, %v33
    %v44 = vpop.permute.xlu0 %43
    %47 = vset.pattern.permute.xlu0 0
    %48 = vperm.xlu0 %47, %v34
    %v49 = vpop.permute.xlu0 %48
    %52 = vset.pattern.permute.xlu0 0
    %53 = vperm.xlu0 %52, %v35
    %v54 = vpop.permute.xlu0 %53
    %v57 = vperm.slane %v31, 0
    %v58 = vperm.slane %v31, 1
    %v59 = vperm.slane %v31, 2
    %v60 = vperm.slane %v31, 3
    %v65 = vmul.f32 %v39, %v57
    %v66 = vmul.f32 %v39, %v58
    %v67 = vmul.f32 %v39, %v59
    %v68 = vmul.f32 %v39, %v60
    %v69 = vmul.f32 %v44, %v57
    %v70 = vmul.f32 %v44, %v58
    %v71 = vmul.f32 %v44, %v59
    %v72 = vmul.f32 %v44, %v60
    %v73 = vmul.f32 %v49, %v57
    %v74 = vmul.f32 %v49, %v58
    %v75 = vmul.f32 %v49, %v59
    %v76 = vmul.f32 %v49, %v60
    %v77 = vmul.f32 %v54, %v57
    %v78 = vmul.f32 %v54, %v58
    %v79 = vmul.f32 %v54, %v59
    %v80 = vmul.f32 %v54, %v60
    %81 = vset.pattern.permute.xlu0 1
    %82 = vperm.xlu0 %81, %v32
    %v83 = vpop.permute.xlu0 %82
    %85 = vset.pattern.permute.xlu0 1
    %86 = vperm.xlu0 %85, %v33
    %v87 = vpop.permute.xlu0 %86
    %89 = vset.pattern.permute.xlu0 1
    %90 = vperm.xlu0 %89, %v34
    %v91 = vpop.permute.xlu0 %90
    %93 = vset.pattern.permute.xlu0 1
    %94 = vperm.xlu0 %93, %v35
    %v95 = vpop.permute.xlu0 %94
    %v97 = vadd.f32 %v65, %v83
    %v98 = vadd.f32 %v66, %v83
    %v99 = vadd.f32 %v67, %v83
    %v100 = vadd.f32 %v68, %v83
    %v101 = vadd.f32 %v69, %v87
    %v102 = vadd.f32 %v70, %v87
    %v103 = vadd.f32 %v71, %v87
    %v104 = vadd.f32 %v72, %v87
    %v105 = vadd.f32 %v73, %v91
    %v106 = vadd.f32 %v74, %v91
    %v107 = vadd.f32 %v75, %v91
    %v108 = vadd.f32 %v76, %v91
    %v109 = vadd.f32 %v77, %v95
    %v110 = vadd.f32 %v78, %v95
    %v111 = vadd.f32 %v79, %v95
    %v112 = vadd.f32 %v80, %v95
    %v113 = vtanh.pop %v97
    %v114 = vtanh.pop %v98
    %v115 = vtanh.pop %v99
    %v116 = vtanh.pop %v100
    %v117 = vtanh.pop %v101
    %v118 = vtanh.pop %v102
    %v119 = vtanh.pop %v103
    %v120 = vtanh.pop %v104
    %v121 = vtanh.pop %v105
    %v122 = vtanh.pop %v106
    %v123 = vtanh.pop %v107
    %v124 = vtanh.pop %v108
    %v125 = vtanh.pop %v109
    %v126 = vtanh.pop %v110
    %v127 = vtanh.pop %v111
    %v128 = vtanh.pop %v112
    %v129 = vld [vmem:[#allocation2] sm:$0xff]
    %v130 = vld [vmem:[#allocation2 + $0x8] sm:$0xff]
    %v131 = vld [vmem:[#allocation2 + $0x10] sm:$0xff]
    %v132 = vld [vmem:[#allocation2 + $0x18] sm:$0xff]
    %133 = vset.pattern.permute.xlu0 2
    %134 = vperm.xlu0 %133, %v32
    %v135 = vpop.permute.xlu0 %134
    %137 = vset.pattern.permute.xlu0 2
    %138 = vperm.xlu0 %137, %v33
    %v139 = vpop.permute.xlu0 %138
    %141 = vset.pattern.permute.xlu0 2
    %142 = vperm.xlu0 %141, %v34
    %v143 = vpop.permute.xlu0 %142
    %145 = vset.pattern.permute.xlu0 2
    %146 = vperm.xlu0 %145, %v35
    %v147 = vpop.permute.xlu0 %146
    %vm149 = vcmask 261120
    %v151 = vsel %vm149, %v129, 0
    %v154 = vsel %vm149, %v130, 0
    %v157 = vsel %vm149, %v131, 0
    %v160 = vsel %vm149, %v132, 0
    %162 = vmatpush.msra.mxu0 0.0
    %163 = vmatpush.msra.mxu0 0.0
    %164 = vmatpush.msra.mxu0 0.0
    %165 = vmatpush.msra.mxu0 0.0
    %166 = vmatpush.msra.mxu0 0.0
    %167 = vmatpush.msra.mxu0 0.0
    %168 = vmatpush.msra.mxu0 0.0
    %169 = vmatpush.msra.mxu0 0.0
    %170 = vmatpush.msra.mxu0 0.0
    %171 = vmatpush.msra.mxu0 0.0
    %172 = vmatpush.msra.mxu0 0.0
    %173 = vmatpush.msra.mxu0 0.0
    %174 = vmatpush.msra.mxu0 %v125
    %175 = vmatpush.msra.mxu0 %v121
    %176 = vmatpush.msra.mxu0 %v117
    %177 = vmatpush.msra.mxu0 %v113
    %178 = vmatmul.f32.gmra.mxu0 %v151
    %v179 = vpop.f32.mrf.mxu0
    %v180 = vadd.f32 %v135, %v179
    %181 = vmatmul.f32.gmra.mxu0 %v154
    %v182 = vpop.f32.mrf.mxu0
    %v183 = vadd.f32 %v139, %v182
    %184 = vmatmul.f32.gmra.mxu0 %v157
    %v185 = vpop.f32.mrf.mxu0
    %v186 = vadd.f32 %v143, %v185
    %187 = vmatmul.f32.gmra.mxu0 %v160
    %v188 = vpop.f32.mrf.mxu0
    %v189 = vadd.f32 %v147, %v188
    %190 = vdwg.mxu0
    %191 = vmatpush.msra.mxu0 0.0
    %192 = vmatpush.msra.mxu0 0.0
    %193 = vmatpush.msra.mxu0 0.0
    %194 = vmatpush.msra.mxu0 0.0
    %195 = vmatpush.msra.mxu0 0.0
    %196 = vmatpush.msra.mxu0 0.0
    %197 = vmatpush.msra.mxu0 0.0
    %198 = vmatpush.msra.mxu0 0.0
    %199 = vmatpush.msra.mxu0 0.0
    %200 = vmatpush.msra.mxu0 0.0
    %201 = vmatpush.msra.mxu0 0.0
    %202 = vmatpush.msra.mxu0 0.0
    %203 = vmatpush.msra.mxu0 %v126
    %204 = vmatpush.msra.mxu0 %v122
    %205 = vmatpush.msra.mxu0 %v118
    %206 = vmatpush.msra.mxu0 %v114
    %207 = vmatmul.f32.gmra.mxu0 %v151
    %v208 = vpop.f32.mrf.mxu0
    %v209 = vadd.f32 %v135, %v208
    %210 = vmatmul.f32.gmra.mxu0 %v154
    %v211 = vpop.f32.mrf.mxu0
    %v212 = vadd.f32 %v139, %v211
    %213 = vmatmul.f32.gmra.mxu0 %v157
    %v214 = vpop.f32.mrf.mxu0
    %v215 = vadd.f32 %v143, %v214
    %216 = vmatmul.f32.gmra.mxu0 %v160
    %v217 = vpop.f32.mrf.mxu0
    %v218 = vadd.f32 %v147, %v217
    %219 = vdwg.mxu0
    %220 = vmatpush.msra.mxu0 0.0
    %221 = vmatpush.msra.mxu0 0.0
    %222 = vmatpush.msra.mxu0 0.0
    %223 = vmatpush.msra.mxu0 0.0
    %224 = vmatpush.msra.mxu0 0.0
    %225 = vmatpush.msra.mxu0 0.0
    %226 = vmatpush.msra.mxu0 0.0
    %227 = vmatpush.msra.mxu0 0.0
    %228 = vmatpush.msra.mxu0 0.0
    %229 = vmatpush.msra.mxu0 0.0
    %230 = vmatpush.msra.mxu0 0.0
    %231 = vmatpush.msra.mxu0 0.0
    %232 = vmatpush.msra.mxu0 %v127
    %233 = vmatpush.msra.mxu0 %v123
    %234 = vmatpush.msra.mxu0 %v119
    %235 = vmatpush.msra.mxu0 %v115
    %236 = vmatmul.f32.gmra.mxu0 %v151
    %v237 = vpop.f32.mrf.mxu0
    %v238 = vadd.f32 %v135, %v237
    %239 = vmatmul.f32.gmra.mxu0 %v154
    %v240 = vpop.f32.mrf.mxu0
    %v241 = vadd.f32 %v139, %v240
    %242 = vmatmul.f32.gmra.mxu0 %v157
    %v243 = vpop.f32.mrf.mxu0
    %v244 = vadd.f32 %v143, %v243
    %245 = vmatmul.f32.gmra.mxu0 %v160
    %v246 = vpop.f32.mrf.mxu0
    %v247 = vadd.f32 %v147, %v246
    %248 = vdwg.mxu0
    %249 = vmatpush.msra.mxu0 0.0
    %250 = vmatpush.msra.mxu0 0.0
    %251 = vmatpush.msra.mxu0 0.0
    %252 = vmatpush.msra.mxu0 0.0
    %253 = vmatpush.msra.mxu0 0.0
    %254 = vmatpush.msra.mxu0 0.0
    %255 = vmatpush.msra.mxu0 0.0
    %256 = vmatpush.msra.mxu0 0.0
    %257 = vmatpush.msra.mxu0 0.0
    %258 = vmatpush.msra.mxu0 0.0
    %259 = vmatpush.msra.mxu0 0.0
    %260 = vmatpush.msra.mxu0 0.0
    %261 = vmatpush.msra.mxu0 %v128
    %262 = vmatpush.msra.mxu0 %v124
    %263 = vmatpush.msra.mxu0 %v120
    %264 = vmatpush.msra.mxu0 %v116
    %265 = vmatmul.f32.gmra.mxu0 %v151
    %v266 = vpop.f32.mrf.mxu0
    %v267 = vadd.f32 %v135, %v266
    %268 = vmatmul.f32.gmra.mxu0 %v154
    %v269 = vpop.f32.mrf.mxu0
    %v270 = vadd.f32 %v139, %v269
    %271 = vmatmul.f32.gmra.mxu0 %v157
    %v272 = vpop.f32.mrf.mxu0
    %v273 = vadd.f32 %v143, %v272
    %274 = vmatmul.f32.gmra.mxu0 %v160
    %v275 = vpop.f32.mrf.mxu0
    %v276 = vadd.f32 %v147, %v275
    %277 = vdwg.mxu0
    %v278 = vtanh.pop %v180
    %v279 = vtanh.pop %v209
    %v280 = vtanh.pop %v238
    %v281 = vtanh.pop %v267
    %v282 = vtanh.pop %v183
    %v283 = vtanh.pop %v212
    %v284 = vtanh.pop %v241
    %v285 = vtanh.pop %v270
    %v286 = vtanh.pop %v186
    %v287 = vtanh.pop %v215
    %v288 = vtanh.pop %v244
    %v289 = vtanh.pop %v273
    %v290 = vtanh.pop %v189
    %v291 = vtanh.pop %v218
    %v292 = vtanh.pop %v247
    %v293 = vtanh.pop %v276
    %s294 = scalar_lea.vmem [#allocation2], 32
    %v295 = vld [vmem:[%s294] sm:$0xff]
    %v296 = vld [vmem:[%s294 + $0x8] sm:$0xff]
    %v297 = vld [vmem:[%s294 + $0x10] sm:$0xff]
    %v298 = vld [vmem:[%s294 + $0x18] sm:$0xff]
    %299 = vset.pattern.permute.xlu0 3
    %300 = vperm.xlu0 %299, %v32
    %v301 = vpop.permute.xlu0 %300
    %303 = vset.pattern.permute.xlu0 3
    %304 = vperm.xlu0 %303, %v33
    %v305 = vpop.permute.xlu0 %304
    %307 = vset.pattern.permute.xlu0 3
    %308 = vperm.xlu0 %307, %v34
    %v309 = vpop.permute.xlu0 %308
    %311 = vset.pattern.permute.xlu0 3
    %312 = vperm.xlu0 %311, %v35
    %v313 = vpop.permute.xlu0 %312
    %v316 = vsel %vm149, %v295, 0
    %v319 = vsel %vm149, %v296, 0
    %v322 = vsel %vm149, %v297, 0
    %v325 = vsel %vm149, %v298, 0
    %327 = vmatpush.msra.mxu0 0.0
    %328 = vmatpush.msra.mxu0 0.0
    %329 = vmatpush.msra.mxu0 0.0
    %330 = vmatpush.msra.mxu0 0.0
    %331 = vmatpush.msra.mxu0 0.0
    %332 = vmatpush.msra.mxu0 0.0
    %333 = vmatpush.msra.mxu0 0.0
    %334 = vmatpush.msra.mxu0 0.0
    %335 = vmatpush.msra.mxu0 0.0
    %336 = vmatpush.msra.mxu0 0.0
    %337 = vmatpush.msra.mxu0 0.0
    %338 = vmatpush.msra.mxu0 0.0
    %339 = vmatpush.msra.mxu0 %v290
    %340 = vmatpush.msra.mxu0 %v286
    %341 = vmatpush.msra.mxu0 %v282
    %342 = vmatpush.msra.mxu0 %v278
    %343 = vmatmul.f32.gmra.mxu0 %v316
    %v344 = vpop.f32.mrf.mxu0
    %v345 = vadd.f32 %v301, %v344
    %346 = vmatmul.f32.gmra.mxu0 %v319
    %v347 = vpop.f32.mrf.mxu0
    %v348 = vadd.f32 %v305, %v347
    %349 = vmatmul.f32.gmra.mxu0 %v322
    %v350 = vpop.f32.mrf.mxu0
    %v351 = vadd.f32 %v309, %v350
    %352 = vmatmul.f32.gmra.mxu0 %v325
    %v353 = vpop.f32.mrf.mxu0
    %v354 = vadd.f32 %v313, %v353
    %355 = vdwg.mxu0
    %356 = vmatpush.msra.mxu0 0.0
    %357 = vmatpush.msra.mxu0 0.0
    %358 = vmatpush.msra.mxu0 0.0
    %359 = vmatpush.msra.mxu0 0.0
    %360 = vmatpush.msra.mxu0 0.0
    %361 = vmatpush.msra.mxu0 0.0
    %362 = vmatpush.msra.mxu0 0.0
    %363 = vmatpush.msra.mxu0 0.0
    %364 = vmatpush.msra.mxu0 0.0
    %365 = vmatpush.msra.mxu0 0.0
    %366 = vmatpush.msra.mxu0 0.0
    %367 = vmatpush.msra.mxu0 0.0
    %368 = vmatpush.msra.mxu0 %v291
    %369 = vmatpush.msra.mxu0 %v287
    %370 = vmatpush.msra.mxu0 %v283
    %371 = vmatpush.msra.mxu0 %v279
    %372 = vmatmul.f32.gmra.mxu0 %v316
    %v373 = vpop.f32.mrf.mxu0
    %v374 = vadd.f32 %v301, %v373
    %375 = vmatmul.f32.gmra.mxu0 %v319
    %v376 = vpop.f32.mrf.mxu0
    %v377 = vadd.f32 %v305, %v376
    %378 = vmatmul.f32.gmra.mxu0 %v322
    %v379 = vpop.f32.mrf.mxu0
    %v380 = vadd.f32 %v309, %v379
    %381 = vmatmul.f32.gmra.mxu0 %v325
    %v382 = vpop.f32.mrf.mxu0
    %v383 = vadd.f32 %v313, %v382
    %384 = vdwg.mxu0
    %385 = vmatpush.msra.mxu0 0.0
    %386 = vmatpush.msra.mxu0 0.0
    %387 = vmatpush.msra.mxu0 0.0
    %388 = vmatpush.msra.mxu0 0.0
    %389 = vmatpush.msra.mxu0 0.0
    %390 = vmatpush.msra.mxu0 0.0
    %391 = vmatpush.msra.mxu0 0.0
    %392 = vmatpush.msra.mxu0 0.0
    %393 = vmatpush.msra.mxu0 0.0
    %394 = vmatpush.msra.mxu0 0.0
    %395 = vmatpush.msra.mxu0 0.0
    %396 = vmatpush.msra.mxu0 0.0
    %397 = vmatpush.msra.mxu0 %v292
    %398 = vmatpush.msra.mxu0 %v288
    %399 = vmatpush.msra.mxu0 %v284
    %400 = vmatpush.msra.mxu0 %v280
    %401 = vmatmul.f32.gmra.mxu0 %v316
    %v402 = vpop.f32.mrf.mxu0
    %v403 = vadd.f32 %v301, %v402
    %404 = vmatmul.f32.gmra.mxu0 %v319
    %v405 = vpop.f32.mrf.mxu0
    %v406 = vadd.f32 %v305, %v405
    %407 = vmatmul.f32.gmra.mxu0 %v322
    %v408 = vpop.f32.mrf.mxu0
    %v409 = vadd.f32 %v309, %v408
    %410 = vmatmul.f32.gmra.mxu0 %v325
    %v411 = vpop.f32.mrf.mxu0
    %v412 = vadd.f32 %v313, %v411
    %413 = vdwg.mxu0
    %414 = vmatpush.msra.mxu0 0.0
    %415 = vmatpush.msra.mxu0 0.0
    %416 = vmatpush.msra.mxu0 0.0
    %417 = vmatpush.msra.mxu0 0.0
    %418 = vmatpush.msra.mxu0 0.0
    %419 = vmatpush.msra.mxu0 0.0
    %420 = vmatpush.msra.mxu0 0.0
    %421 = vmatpush.msra.mxu0 0.0
    %422 = vmatpush.msra.mxu0 0.0
    %423 = vmatpush.msra.mxu0 0.0
    %424 = vmatpush.msra.mxu0 0.0
    %425 = vmatpush.msra.mxu0 0.0
    %426 = vmatpush.msra.mxu0 %v293
    %427 = vmatpush.msra.mxu0 %v289
    %428 = vmatpush.msra.mxu0 %v285
    %429 = vmatpush.msra.mxu0 %v281
    %430 = vmatmul.f32.gmra.mxu0 %v316
    %v431 = vpop.f32.mrf.mxu0
    %v432 = vadd.f32 %v301, %v431
    %433 = vmatmul.f32.gmra.mxu0 %v319
    %v434 = vpop.f32.mrf.mxu0
    %v435 = vadd.f32 %v305, %v434
    %436 = vmatmul.f32.gmra.mxu0 %v322
    %v437 = vpop.f32.mrf.mxu0
    %v438 = vadd.f32 %v309, %v437
    %439 = vmatmul.f32.gmra.mxu0 %v325
    %v440 = vpop.f32.mrf.mxu0
    %v441 = vadd.f32 %v313, %v440
    %442 = vdwg.mxu0
    %v443 = vtanh.pop %v345
    %v444 = vtanh.pop %v374
    %v445 = vtanh.pop %v403
    %v446 = vtanh.pop %v432
    %v447 = vtanh.pop %v348
    %v448 = vtanh.pop %v377
    %v449 = vtanh.pop %v406
    %v450 = vtanh.pop %v435
    %v451 = vtanh.pop %v351
    %v452 = vtanh.pop %v380
    %v453 = vtanh.pop %v409
    %v454 = vtanh.pop %v438
    %v455 = vtanh.pop %v354
    %v456 = vtanh.pop %v383
    %v457 = vtanh.pop %v412
    %v458 = vtanh.pop %v441
    %s459 = scalar_lea.vmem [#allocation2], 64
    %v460 = vld [vmem:[%s459] sm:$0xff]
    %v461 = vld [vmem:[%s459 + $0x8] sm:$0xff]
    %v462 = vld [vmem:[%s459 + $0x10] sm:$0xff]
    %v463 = vld [vmem:[%s459 + $0x18] sm:$0xff]
    %464 = vset.pattern.permute.xlu0 4
    %465 = vperm.xlu0 %464, %v32
    %v466 = vpop.permute.xlu0 %465
    %468 = vset.pattern.permute.xlu0 4
    %469 = vperm.xlu0 %468, %v33
    %v470 = vpop.permute.xlu0 %469
    %472 = vset.pattern.permute.xlu0 4
    %473 = vperm.xlu0 %472, %v34
    %v474 = vpop.permute.xlu0 %473
    %476 = vset.pattern.permute.xlu0 4
    %477 = vperm.xlu0 %476, %v35
    %v478 = vpop.permute.xlu0 %477
    %v481 = vsel %vm149, %v460, 0
    %v484 = vsel %vm149, %v461, 0
    %v487 = vsel %vm149, %v462, 0
    %v490 = vsel %vm149, %v463, 0
    %492 = vmatpush.msra.mxu0 0.0
    %493 = vmatpush.msra.mxu0 0.0
    %494 = vmatpush.msra.mxu0 0.0
    %495 = vmatpush.msra.mxu0 0.0
    %496 = vmatpush.msra.mxu0 0.0
    %497 = vmatpush.msra.mxu0 0.0
    %498 = vmatpush.msra.mxu0 0.0
    %499 = vmatpush.msra.mxu0 0.0
    %500 = vmatpush.msra.mxu0 0.0
    %501 = vmatpush.msra.mxu0 0.0
    %502 = vmatpush.msra.mxu0 0.0
    %503 = vmatpush.msra.mxu0 0.0
    %504 = vmatpush.msra.mxu0 %v455
    %505 = vmatpush.msra.mxu0 %v451
    %506 = vmatpush.msra.mxu0 %v447
    %507 = vmatpush.msra.mxu0 %v443
    %508 = vmatmul.f32.gmra.mxu0 %v481
    %v509 = vpop.f32.mrf.mxu0
    %v510 = vadd.f32 %v466, %v509
    %511 = vmatmul.f32.gmra.mxu0 %v484
    %v512 = vpop.f32.mrf.mxu0
    %v513 = vadd.f32 %v470, %v512
    %514 = vmatmul.f32.gmra.mxu0 %v487
    %v515 = vpop.f32.mrf.mxu0
    %v516 = vadd.f32 %v474, %v515
    %517 = vmatmul.f32.gmra.mxu0 %v490
    %v518 = vpop.f32.mrf.mxu0
    %v519 = vadd.f32 %v478, %v518
    %520 = vdwg.mxu0
    %521 = vmatpush.msra.mxu0 0.0
    %522 = vmatpush.msra.mxu0 0.0
    %523 = vmatpush.msra.mxu0 0.0
    %524 = vmatpush.msra.mxu0 0.0
    %525 = vmatpush.msra.mxu0 0.0
    %526 = vmatpush.msra.mxu0 0.0
    %527 = vmatpush.msra.mxu0 0.0
    %528 = vmatpush.msra.mxu0 0.0
    %529 = vmatpush.msra.mxu0 0.0
    %530 = vmatpush.msra.mxu0 0.0
    %531 = vmatpush.msra.mxu0 0.0
    %532 = vmatpush.msra.mxu0 0.0
    %533 = vmatpush.msra.mxu0 %v456
    %534 = vmatpush.msra.mxu0 %v452
    %535 = vmatpush.msra.mxu0 %v448
    %536 = vmatpush.msra.mxu0 %v444
    %537 = vmatmul.f32.gmra.mxu0 %v481
    %v538 = vpop.f32.mrf.mxu0
    %v539 = vadd.f32 %v466, %v538
    %540 = vmatmul.f32.gmra.mxu0 %v484
    %v541 = vpop.f32.mrf.mxu0
    %v542 = vadd.f32 %v470, %v541
    %543 = vmatmul.f32.gmra.mxu0 %v487
    %v544 = vpop.f32.mrf.mxu0
    %v545 = vadd.f32 %v474, %v544
    %546 = vmatmul.f32.gmra.mxu0 %v490
    %v547 = vpop.f32.mrf.mxu0
    %v548 = vadd.f32 %v478, %v547
    %549 = vdwg.mxu0
    %550 = vmatpush.msra.mxu0 0.0
    %551 = vmatpush.msra.mxu0 0.0
    %552 = vmatpush.msra.mxu0 0.0
    %553 = vmatpush.msra.mxu0 0.0
    %554 = vmatpush.msra.mxu0 0.0
    %555 = vmatpush.msra.mxu0 0.0
    %556 = vmatpush.msra.mxu0 0.0
    %557 = vmatpush.msra.mxu0 0.0
    %558 = vmatpush.msra.mxu0 0.0
    %559 = vmatpush.msra.mxu0 0.0
    %560 = vmatpush.msra.mxu0 0.0
    %561 = vmatpush.msra.mxu0 0.0
    %562 = vmatpush.msra.mxu0 %v457
    %563 = vmatpush.msra.mxu0 %v453
    %564 = vmatpush.msra.mxu0 %v449
    %565 = vmatpush.msra.mxu0 %v445
    %566 = vmatmul.f32.gmra.mxu0 %v481
    %v567 = vpop.f32.mrf.mxu0
    %v568 = vadd.f32 %v466, %v567
    %569 = vmatmul.f32.gmra.mxu0 %v484
    %v570 = vpop.f32.mrf.mxu0
    %v571 = vadd.f32 %v470, %v570
    %572 = vmatmul.f32.gmra.mxu0 %v487
    %v573 = vpop.f32.mrf.mxu0
    %v574 = vadd.f32 %v474, %v573
    %575 = vmatmul.f32.gmra.mxu0 %v490
    %v576 = vpop.f32.mrf.mxu0
    %v577 = vadd.f32 %v478, %v576
    %578 = vdwg.mxu0
    %579 = vmatpush.msra.mxu0 0.0
    %580 = vmatpush.msra.mxu0 0.0
    %581 = vmatpush.msra.mxu0 0.0
    %582 = vmatpush.msra.mxu0 0.0
    %583 = vmatpush.msra.mxu0 0.0
    %584 = vmatpush.msra.mxu0 0.0
    %585 = vmatpush.msra.mxu0 0.0
    %586 = vmatpush.msra.mxu0 0.0
    %587 = vmatpush.msra.mxu0 0.0
    %588 = vmatpush.msra.mxu0 0.0
    %589 = vmatpush.msra.mxu0 0.0
    %590 = vmatpush.msra.mxu0 0.0
    %591 = vmatpush.msra.mxu0 %v458
    %592 = vmatpush.msra.mxu0 %v454
    %593 = vmatpush.msra.mxu0 %v450
    %594 = vmatpush.msra.mxu0 %v446
    %595 = vmatmul.f32.gmra.mxu0 %v481
    %v596 = vpop.f32.mrf.mxu0
    %v597 = vadd.f32 %v466, %v596
    %598 = vmatmul.f32.gmra.mxu0 %v484
    %v599 = vpop.f32.mrf.mxu0
    %v600 = vadd.f32 %v470, %v599
    %601 = vmatmul.f32.gmra.mxu0 %v487
    %v602 = vpop.f32.mrf.mxu0
    %v603 = vadd.f32 %v474, %v602
    %604 = vmatmul.f32.gmra.mxu0 %v490
    %v605 = vpop.f32.mrf.mxu0
    %v606 = vadd.f32 %v478, %v605
    %607 = vdwg.mxu0
    %v608 = vtanh.pop %v510
    %v609 = vtanh.pop %v539
    %v610 = vtanh.pop %v568
    %v611 = vtanh.pop %v597
    %v612 = vtanh.pop %v513
    %v613 = vtanh.pop %v542
    %v614 = vtanh.pop %v571
    %v615 = vtanh.pop %v600
    %v616 = vtanh.pop %v516
    %v617 = vtanh.pop %v545
    %v618 = vtanh.pop %v574
    %v619 = vtanh.pop %v603
    %v620 = vtanh.pop %v519
    %v621 = vtanh.pop %v548
    %v622 = vtanh.pop %v577
    %v623 = vtanh.pop %v606
    %624 = vset.pattern.permute.xlu0 5
    %625 = vperm.xlu0 %624, %v32
    %v626 = vpop.permute.xlu0 %625
    %628 = vset.pattern.permute.xlu0 5
    %629 = vperm.xlu0 %628, %v33
    %v630 = vpop.permute.xlu0 %629
    %632 = vset.pattern.permute.xlu0 5
    %633 = vperm.xlu0 %632, %v34
    %v634 = vpop.permute.xlu0 %633
    %636 = vset.pattern.permute.xlu0 5
    %637 = vperm.xlu0 %636, %v35
    %v638 = vpop.permute.xlu0 %637
    %v640 = vmul.f32 %v608, %v626
    %v641 = vmul.f32 %v609, %v626
    %v642 = vmul.f32 %v610, %v626
    %v643 = vmul.f32 %v611, %v626
    %v644 = vmul.f32 %v612, %v630
    %v645 = vmul.f32 %v613, %v630
    %v646 = vmul.f32 %v614, %v630
    %v647 = vmul.f32 %v615, %v630
    %v648 = vmul.f32 %v616, %v634
    %v649 = vmul.f32 %v617, %v634
    %v650 = vmul.f32 %v618, %v634
    %v651 = vmul.f32 %v619, %v634
    %v652 = vmul.f32 %v620, %v638
    %v653 = vmul.f32 %v621, %v638
    %v654 = vmul.f32 %v622, %v638
    %v655 = vmul.f32 %v623, %v638
    %v656 = vadd.f32 %v640, %v644
    %v657 = vadd.f32 %v656, %v648
    %v658 = vadd.f32 %v657, %v652
    %v659 = vrot.slane %v658, 4
    %v660 = vadd.f32 %v658, %v659
    %v661 = vrot.slane %v660, 2
    %v662 = vadd.f32 %v660, %v661
    %v663 = vrot.slane %v662, 1
    %v664 = vadd.f32 %v662, %v663
    %v665 = vadd.f32 %v641, %v645
    %v666 = vadd.f32 %v665, %v649
    %v667 = vadd.f32 %v666, %v653
    %v668 = vrot.slane %v667, 4
    %v669 = vadd.f32 %v667, %v668
    %v670 = vrot.slane %v669, 2
    %v671 = vadd.f32 %v669, %v670
    %v672 = vrot.slane %v671, 1
    %v673 = vadd.f32 %v671, %v672
    %v674 = vadd.f32 %v642, %v646
    %v675 = vadd.f32 %v674, %v650
    %v676 = vadd.f32 %v675, %v654
    %v677 = vrot.slane %v676, 4
    %v678 = vadd.f32 %v676, %v677
    %v679 = vrot.slane %v678, 2
    %v680 = vadd.f32 %v678, %v679
    %v681 = vrot.slane %v680, 1
    %v682 = vadd.f32 %v680, %v681
    %vm683 = vcmask 949248
    %v684 = vsel %vm683, %v643, 0.0
    %v685 = vsel %vm683, %v647, 0.0
    %v686 = vadd.f32 %v684, %v685
    %v687 = vsel %vm683, %v651, 0.0
    %v688 = vadd.f32 %v686, %v687
    %v689 = vsel %vm683, %v655, 0.0
    %v690 = vadd.f32 %v688, %v689
    %v691 = vrot.slane %v690, 4
    %v692 = vadd.f32 %v690, %v691
    %v693 = vrot.slane %v692, 2
    %v694 = vadd.f32 %v692, %v693
    %v695 = vrot.slane %v694, 1
    %v696 = vadd.f32 %v694, %v695
    %697 = vset.pattern.permute.xlu0 6
    %698 = vperm.xlu0 %697, %v32
    %v699 = vpop.permute.xlu0 %698
    %v701 = vadd.f32 %v664, %v699
    %v702 = vadd.f32 %v673, %v699
    %v703 = vadd.f32 %v682, %v699
    %v704 = vadd.f32 %v696, %v699
    %v709 = vrot.slane %v702, 7
    %v710 = vrot.slane %v703, 6
    %v711 = vrot.slane %v704, 5
    %vm712 = vcmask 1040384
    %v713 = vsel %vm712, %v701, %v709
    %vm714 = vcmask 1042434
    %v715 = vsel %vm714, %v710, %v711
    %vm716 = vcmask 1041408
    %v717 = vsel %vm716, %v713, %v715
    %v719 = vlaneseq
    %vm720 = vcmp.ge.s32.totalorder %v719, 0
    %vm721 = vcmp.lt.s32.totalorder %v719, 500
    %vm722 = vmand %vm720, %vm721
    %723 = vst.msk [vmem:[#allocation5] sm:$0xf] %vm722, %v717
    // Predicated region
    $region18: #{tpu_custom_call.1} parent=1 // pred_check
      _
    $region19: #{tpu_custom_call.1} parent=1 // pred_check_branch
      %725 = sbr.rel (0) target = $region21
    $region20: #{tpu_custom_call.1} parent=1 // pred_region
      %727 = vsyncadd [#allocation4], 0
      %s729 = sshll.u32 [#allocation5], 4
      %s730 = int_to_ptr.vmem [resolvable:$true] %s729
      %s731 = sshll.u32 %s3, 4
      %s732 = int_to_ptr.hbm [resolvable:$true] %s731
      %734 = dma.vmem_to_hbm [thread:$0]  %s730, 64, %s732, [#allocation4]
    $region21: #{tpu_custom_call.1} parent=1 // pred_fallthru
      _
    // Predicated region
    $region22: #{tpu_custom_call.1} parent=1 // pred_check
      _
    $region23: #{tpu_custom_call.1} parent=1 // pred_check_branch
      %736 = sbr.rel (0) target = $region25
    $region24: #{tpu_custom_call.1} parent=1 // pred_region
      %738 = dma.done [#allocation4], 64
    $region25: #{tpu_custom_call.1} parent=1 // pred_fallthru
      _
    %739 = vsyncpa [#allocation3], 1
    %740 = vsyncpa [#allocation4], 1

</llo_original>
